<compile_context>
chip_gen: v6e
topology: v6e:2x2x1
jax: 0.10.0
libtpu: 0.0.40
codegen_flags: <defaults>
</compile_context>

<pallas_src>
import jax
import jax.numpy as jnp
from jax.experimental import pallas as pl
from jax.experimental.pallas import tpu as pltpu

# ----------------------------- config (synthetic) -----------------------------
EMBEDDING_SIZE = 32          # config.Model.embedding_size
LATENCY_FEATURE_SIZE = 16    # config.Model.latency_feature_size
N_NODES = 8                  # nodes per trace graph
BATCH = 4                    # graphs in the batch
GRAPHS_PER_BLOCK = 4         # graphs fused per grid step (block-diag mask)
IN_DIM = EMBEDDING_SIZE * 3  # linear_input in_features
F_HID = LATENCY_FEATURE_SIZE
F_OUT = 2 * LATENCY_FEATURE_SIZE  # GATConv out_feats * num_heads (1 head)
NEG_SLOPE = 0.2              # DGL GATConv default leaky_relu slope


# ------------------------------- Pallas kernel --------------------------------
def _level_latency_kernel(embed_ref, adjT_ref, w1_ref, wg_ref, attn_ref,
                          vec_ref, out_ref):
    # per-group blocks (leading group dim of the block is 1); M = GPB * N nodes
    emb = embed_ref[0]                       # (M, 3E)
    adj = adjT_ref[0]                        # (M, M) dest-major block-diag mask

    b1 = vec_ref[:, :F_HID]                  # (1, F_HID)
    bg = vec_ref[:, F_HID:]                  # (1, F_OUT)

    # ---- linear_input + relu ----
    x = jnp.dot(emb, w1_ref[...], preferred_element_type=jnp.float32) + b1
    x = jnp.maximum(x, 0.0)                  # (M, F_HID)

    # ---- GATConv (single head), fc has no bias ----
    h = jnp.dot(x, wg_ref[...], preferred_element_type=jnp.float32)  # (M, F_OUT)

    # attention terms via one small MXU matmul: (M, 2) = h @ [al^T | ar^T]
    scores = jnp.dot(h, attn_ref[...], preferred_element_type=jnp.float32)
    el = scores[:, 0:1]                      # (M, 1) source term
    er = scores[:, 1:2]                      # (M, 1) destination term

    # dest-major logits: e[v, u] = leaky_relu(er[v] + el[u])
    e = er + jnp.transpose(el, (1, 0))       # (M_dst, M_src)
    e = jnp.where(e > 0, e, NEG_SLOPE * e)

    # edge softmax over incoming edges of each destination (last / lane axis);
    # block-diagonal mask keeps graphs in the group independent.
    masked = adj > 0
    e_m = jnp.where(masked, e, jnp.float32(-1e30))
    m = jnp.max(e_m, axis=-1, keepdims=True)             # (M, 1)
    p = jnp.where(masked, jnp.exp(e_m - m), 0.0)         # single mask mechanism
    denom = jnp.maximum(jnp.sum(p, axis=-1, keepdims=True), jnp.float32(1e-30))
    alpha = p * pl.reciprocal(denom, approx=True)        # EUP vrcp

    # aggregation: out[v] = sum_u alpha[v, u] * h[u]  ==  alpha @ h (no transpose)
    out = jnp.dot(alpha, h, preferred_element_type=jnp.float32) + bg  # (M, F_OUT)

    # split + tanh, emitted as one lane-dense buffer: [mu | tanh(logvar)]
    col = jax.lax.broadcasted_iota(jnp.int32, out.shape, dimension=1)
    out_ref[0] = jnp.where(col < F_HID, out, jnp.tanh(out))


def level_latency_encoder(embed_b, adj_b, params,
                          graphs_per_block=GRAPHS_PER_BLOCK):
    """embed_b: (B, N, 3E) float32; adj_b: (B, N, N) 0/1 adjacency with
    adj[b, u, v] = 1 iff edge u->v in the bidirected graph."""
    B, N, _ = embed_b.shape
    gpb = min(graphs_per_block, B)
    assert B % gpb == 0, "batch must be divisible by graphs_per_block"
    nb = B // gpb
    M = gpb * N

    # dest-major adjacency (rows = destination, cols = source); numerically a
    # no-op since the to_bidirected adjacency is symmetric. Then fuse gpb
    # graphs per grid step as a block-diagonal (M, M) mask (free XLA ops).
    adjT_b = jnp.swapaxes(adj_b, -1, -2).reshape(nb, gpb, N, N)
    eye = jnp.eye(gpb, dtype=adjT_b.dtype)
    adj_bd = jnp.einsum('gbij,bc->gbicj', adjT_b, eye).reshape(nb, M, M)

    emb_flat = embed_b.reshape(nb, M, IN_DIM)

    # pack the tiny parameter vectors to cut DMA descriptor count
    attn = jnp.concatenate([params["attn_l"].T, params["attn_r"].T], axis=1)  # (F_OUT, 2)
    vec = jnp.concatenate([params["b1"], params["bg"]], axis=-1)  # (1, F_HID+F_OUT)

    out = pl.pallas_call(
        _level_latency_kernel,
        out_shape=jax.ShapeDtypeStruct((nb, M, F_OUT), jnp.float32),
        grid=(nb,),
        in_specs=[
            pl.BlockSpec((1, M, IN_DIM), lambda g: (g, 0, 0)),        # embed
            pl.BlockSpec((1, M, M), lambda g: (g, 0, 0)),             # adj (block-diag)
            pl.BlockSpec((IN_DIM, F_HID), lambda g: (0, 0)),          # w1 (untiled)
            pl.BlockSpec((F_HID, F_OUT), lambda g: (0, 0)),           # wg (untiled)
            pl.BlockSpec((F_OUT, 2), lambda g: (0, 0)),               # [al^T | ar^T]
            pl.BlockSpec((1, F_HID + F_OUT), lambda g: (0, 0)),       # [b1 | bg]
        ],
        out_specs=pl.BlockSpec((1, M, F_OUT), lambda g: (g, 0, 0)),
        compiler_params=pltpu.CompilerParams(
            dimension_semantics=("parallel",)),
    )(emb_flat, adj_bd, params["w1"], params["wg"], attn, vec)

    # free XLA reshape/slices outside the kernel
    out = out.reshape(B, N, F_OUT)
    return out[..., :F_HID], out[..., F_HID:]


# --------------------------- pure-JAX reference --------------------------------
def _reference_single(embed, adj, p):
    x = jnp.maximum(embed @ p["w1"] + p["b1"], 0.0)
    h = x @ p["wg"]
    el = jnp.sum(h * p["attn_l"], axis=-1, keepdims=True)
    er = jnp.sum(h * p["attn_r"], axis=-1, keepdims=True)
    e = el + er.T                                   # src-major e[u, v]
    e = jnp.where(e > 0, e, NEG_SLOPE * e)
    e = jnp.where(adj > 0, e, -1e30)
    m = jnp.max(e, axis=0, keepdims=True)
    q = jnp.exp(e - m) * adj
    alpha = q / jnp.maximum(jnp.sum(q, axis=0, keepdims=True), 1e-30)
    out = alpha.T @ h + p["bg"]
    return out[:, :F_HID], jnp.tanh(out[:, F_HID:])


# ------------------------------------ main -------------------------------------
if __name__ == "__main__":
    key = jax.random.PRNGKey(0)
    (k_embed, k_adj, k_w1, k_b1, k_wg, k_al, k_ar, k_bg) = jax.random.split(key, 8)

    # deterministic synthetic parameters (shapes from module __init__)
    params = {
        # nn.Linear(embedding_size*3, latency_feature_size): stored as W^T
        "w1": 0.1 * jax.random.normal(k_w1, (IN_DIM, F_HID), jnp.float32),
        "b1": 0.1 * jax.random.normal(k_b1, (1, F_HID), jnp.float32),
        # GATConv fc weight (no bias): (F, 2F) stored transposed for x @ wg
        "wg": 0.1 * jax.random.normal(k_wg, (F_HID, F_OUT), jnp.float32),
        # attention vectors attn_l / attn_r: (1, num_heads*out_feats)
        "attn_l": 0.1 * jax.random.normal(k_al, (1, F_OUT), jnp.float32),
        "attn_r": 0.1 * jax.random.normal(k_ar, (1, F_OUT), jnp.float32),
        # GATConv output bias (bias=True default in DGL)
        "bg": 0.1 * jax.random.normal(k_bg, (1, F_OUT), jnp.float32),
    }

    # batch of node embeddings (B, N, 3*embedding_size)
    embed = jax.random.normal(k_embed, (BATCH, N_NODES, IN_DIM), jnp.float32)

    # batch of small directed trace graphs -> bidirected dense adjacency
    eye = jnp.eye(N_NODES, dtype=jnp.float32)
    A_dir = (jax.random.uniform(k_adj, (BATCH, N_NODES, N_NODES)) < 0.3)
    A_dir = A_dir.astype(jnp.float32) * (1.0 - eye)          # no self-loops
    # dgl.to_bidirected: symmetrize + dedup (dense adjacency dedups naturally)
    adj = jnp.maximum(A_dir, jnp.swapaxes(A_dir, -1, -2))

    mu, logvar = level_latency_encoder(embed, adj, params)
    jax.block_until_ready((mu, logvar))

    mu_ref, logvar_ref = jax.vmap(lambda e, a: _reference_single(e, a, params))(embed, adj)

    assert mu.shape == (BATCH, N_NODES, F_HID)
    assert logvar.shape == (BATCH, N_NODES, F_HID)
    # tolerance loosened slightly for pl.reciprocal(approx=True)
    assert jnp.allclose(mu, mu_ref, atol=2e-3, rtol=2e-3)
    assert jnp.allclose(logvar, logvar_ref, atol=2e-3, rtol=2e-3)

    print("KERNEL_OK")
</pallas_src>

<mosaic_0001>
module attributes {stable_mosaic.version = 11 : i64} {
  func.func @_level_latency_kernel(%arg0: i32, %arg1: memref<1x32x96xf32, #tpu.memory_space<vmem>>, %arg2: memref<1x32x32xf32, #tpu.memory_space<vmem>>, %arg3: memref<96x16xf32, #tpu.memory_space<vmem>>, %arg4: memref<16x32xf32, #tpu.memory_space<vmem>>, %arg5: memref<32x2xf32, #tpu.memory_space<vmem>>, %arg6: memref<1x48xf32, #tpu.memory_space<vmem>>, %arg7: memref<1x32x32xf32, #tpu.memory_space<vmem>>) attributes {dimension_semantics = [#tpu.dimension_semantics<parallel>], iteration_bounds = array<i64: 1>, scalar_prefetch = 0 : i64, scratch_operands = 0 : i64, tpu.core_type = #tpu.core_type<tc>, window_params = [{transform_indices = @transform_0, window_bounds = array<i64: 1, 32, 96>}, {transform_indices = @transform_1, window_bounds = array<i64: 1, 32, 32>}, {pipeline_mode = #tpu.pipeline_mode<synchronous>, transform_indices = @transform_2, window_bounds = array<i64: 96, 16>}, {pipeline_mode = #tpu.pipeline_mode<synchronous>, transform_indices = @transform_3, window_bounds = array<i64: 16, 32>}, {pipeline_mode = #tpu.pipeline_mode<synchronous>, transform_indices = @transform_4, window_bounds = array<i64: 32, 2>}, {pipeline_mode = #tpu.pipeline_mode<synchronous>, transform_indices = @transform_5, window_bounds = array<i64: 1, 48>}, {transform_indices = @transform_6, window_bounds = array<i64: 1, 32, 32>}]} {
    %c0 = arith.constant 0 : index
    %c0_0 = arith.constant 0 : index
    %c0_1 = arith.constant 0 : index
    %0 = vector.load %arg1[%c0, %c0_0, %c0_1] : memref<1x32x96xf32, #tpu.memory_space<vmem>>, vector<1x32x96xf32>
    %1 = vector.shape_cast %0 : vector<1x32x96xf32> to vector<32x96xf32>
    %c0_2 = arith.constant 0 : index
    %c0_3 = arith.constant 0 : index
    %c0_4 = arith.constant 0 : index
    %2 = vector.load %arg2[%c0_2, %c0_3, %c0_4] : memref<1x32x32xf32, #tpu.memory_space<vmem>>, vector<1x32x32xf32>
    %3 = vector.shape_cast %2 : vector<1x32x32xf32> to vector<32x32xf32>
    %c0_5 = arith.constant 0 : index
    %c0_6 = arith.constant 0 : index
    %4 = vector.load %arg6[%c0_5, %c0_6] : memref<1x48xf32, #tpu.memory_space<vmem>>, vector<1x16xf32>
    %c0_7 = arith.constant 0 : index
    %c16 = arith.constant 16 : index
    %5 = vector.load %arg6[%c0_7, %c16] : memref<1x48xf32, #tpu.memory_space<vmem>>, vector<1x32xf32>
    %c0_8 = arith.constant 0 : index
    %c0_9 = arith.constant 0 : index
    %6 = vector.load %arg3[%c0_8, %c0_9] : memref<96x16xf32, #tpu.memory_space<vmem>>, vector<96x16xf32>
    %cst = arith.constant dense<0.000000e+00> : vector<32x16xf32>
    %7 = tpu.matmul %1, %6, %cst {dimension_numbers = #tpu.dot_dimension_numbers<[1], [0], [0], [1], [0, 0, 1, 1], [], []>} : vector<32x96xf32>, vector<96x16xf32>, vector<32x16xf32> -> vector<32x16xf32>
    %8 = vector.broadcast %4 : vector<1x16xf32> to vector<32x16xf32>
    %9 = arith.addf %7, %8 : vector<32x16xf32>
    %cst_10 = arith.constant 0.000000e+00 : f32
    %10 = vector.broadcast %cst_10 : f32 to vector<32x16xf32>
    %11 = arith.maximumf %9, %10 : vector<32x16xf32>
    %c0_11 = arith.constant 0 : index
    %c0_12 = arith.constant 0 : index
    %12 = vector.load %arg4[%c0_11, %c0_12] : memref<16x32xf32, #tpu.memory_space<vmem>>, vector<16x32xf32>
    %cst_13 = arith.constant dense<0.000000e+00> : vector<32x32xf32>
    %13 = tpu.matmul %11, %12, %cst_13 {dimension_numbers = #tpu.dot_dimension_numbers<[1], [0], [0], [1], [0, 0, 1, 1], [], []>} : vector<32x16xf32>, vector<16x32xf32>, vector<32x32xf32> -> vector<32x32xf32>
    %c0_14 = arith.constant 0 : index
    %c0_15 = arith.constant 0 : index
    %14 = vector.load %arg5[%c0_14, %c0_15] : memref<32x2xf32, #tpu.memory_space<vmem>>, vector<32x2xf32>
    %cst_16 = arith.constant dense<0.000000e+00> : vector<32x2xf32>
    %15 = tpu.matmul %13, %14, %cst_16 {dimension_numbers = #tpu.dot_dimension_numbers<[1], [0], [0], [1], [0, 0, 1, 1], [], []>} : vector<32x32xf32>, vector<32x2xf32>, vector<32x2xf32> -> vector<32x2xf32>
    %16 = vector.extract_strided_slice %15 {offsets = [0, 0], sizes = [32, 1], strides = [1, 1]} : vector<32x2xf32> to vector<32x1xf32>
    %17 = vector.extract_strided_slice %15 {offsets = [0, 1], sizes = [32, 1], strides = [1, 1]} : vector<32x2xf32> to vector<32x1xf32>
    %18 = tpu.transpose %16, [1, 0] : vector<32x1xf32> -> vector<1x32xf32>
    %19 = vector.broadcast %17 : vector<32x1xf32> to vector<32x32xf32>
    %20 = vector.broadcast %18 : vector<1x32xf32> to vector<32x32xf32>
    %21 = arith.addf %19, %20 : vector<32x32xf32>
    %cst_17 = arith.constant 0.000000e+00 : f32
    %22 = vector.broadcast %cst_17 : f32 to vector<32x32xf32>
    %23 = arith.cmpf ogt, %21, %22 : vector<32x32xf32>
    %cst_18 = arith.constant 2.000000e-01 : f32
    %24 = vector.broadcast %cst_18 : f32 to vector<32x32xf32>
    %25 = arith.mulf %24, %21 : vector<32x32xf32>
    %26 = arith.select %23, %21, %25 : vector<32x32xi1>, vector<32x32xf32>
    %cst_19 = arith.constant 0.000000e+00 : f32
    %27 = vector.broadcast %cst_19 : f32 to vector<32x32xf32>
    %28 = arith.cmpf ogt, %3, %27 : vector<32x32xf32>
    %cst_20 = arith.constant -1.000000e+30 : f32
    %29 = vector.broadcast %cst_20 : f32 to vector<32x32xf32>
    %30 = arith.select %28, %26, %29 : vector<32x32xi1>, vector<32x32xf32>
    %cst_21 = arith.constant dense<0xFF800000> : vector<32xf32>
    %31 = vector.multi_reduction <maximumf>, %30, %cst_21 [1] : vector<32x32xf32> to vector<32xf32>
    %32 = vector.shape_cast %31 : vector<32xf32> to vector<32x1xf32>
    %33 = vector.broadcast %32 : vector<32x1xf32> to vector<32x32xf32>
    %34 = arith.subf %30, %33 : vector<32x32xf32>
    %35 = math.exp %34 : vector<32x32xf32>
    %cst_22 = arith.constant 0.000000e+00 : f32
    %36 = vector.broadcast %cst_22 : f32 to vector<32x32xf32>
    %37 = arith.select %28, %35, %36 : vector<32x32xi1>, vector<32x32xf32>
    %cst_23 = arith.constant dense<0.000000e+00> : vector<32xf32>
    %38 = vector.multi_reduction <add>, %37, %cst_23 [1] : vector<32x32xf32> to vector<32xf32>
    %39 = vector.shape_cast %38 : vector<32xf32> to vector<32x1xf32>
    %cst_24 = arith.constant 1.000000e-30 : f32
    %40 = vector.broadcast %cst_24 : f32 to vector<32x1xf32>
    %41 = arith.maximumf %39, %40 : vector<32x1xf32>
    %42 = tpu.reciprocal %41 {approx = true} : vector<32x1xf32> -> vector<32x1xf32>
    %43 = vector.broadcast %42 : vector<32x1xf32> to vector<32x32xf32>
    %44 = arith.mulf %37, %43 : vector<32x32xf32>
    %cst_25 = arith.constant dense<0.000000e+00> : vector<32x32xf32>
    %45 = tpu.matmul %44, %13, %cst_25 {dimension_numbers = #tpu.dot_dimension_numbers<[1], [0], [0], [1], [0, 0, 1, 1], [], []>} : vector<32x32xf32>, vector<32x32xf32>, vector<32x32xf32> -> vector<32x32xf32>
    %46 = vector.broadcast %5 : vector<1x32xf32> to vector<32x32xf32>
    %47 = arith.addf %45, %46 : vector<32x32xf32>
    %48 = tpu.iota {dimensions = array<i32: 1>} : vector<32x32xi32>
    %c16_i32 = arith.constant 16 : i32
    %49 = vector.broadcast %c16_i32 : i32 to vector<32x32xi32>
    %50 = arith.cmpi slt, %48, %49 : vector<32x32xi32>
    %51 = math.tanh %47 : vector<32x32xf32>
    %52 = arith.select %50, %47, %51 : vector<32x32xi1>, vector<32x32xf32>
    %c0_26 = arith.constant 0 : index
    %c0_27 = arith.constant 0 : index
    %c0_28 = arith.constant 0 : index
    %53 = vector.load %arg7[%c0_26, %c0_27, %c0_28] : memref<1x32x32xf32, #tpu.memory_space<vmem>>, vector<1x32x32xf32>
    %54 = vector.shape_cast %53 : vector<1x32x32xf32> to vector<32x32xf32>
    %55 = vector.shape_cast %52 : vector<32x32xf32> to vector<1x32x32xf32>
    tpu.vector_store %arg7[%c0_26, %c0_27, %c0_28], %55 {strides = array<i32>} : memref<1x32x32xf32, #tpu.memory_space<vmem>>, vector<1x32x32xf32>,
    return
  }
  func.func @transform_0(%arg0: i32) -> (i32, i32, i32) {
    %c0_i32 = arith.constant 0 : i32
    %c0_i32_0 = arith.constant 0 : i32
    %c0_i32_1 = arith.constant 0 : i32
    return %arg0, %c0_i32, %c0_i32_0 : i32, i32, i32
  }
  func.func @transform_1(%arg0: i32) -> (i32, i32, i32) {
    %c0_i32 = arith.constant 0 : i32
    %c0_i32_0 = arith.constant 0 : i32
    %c0_i32_1 = arith.constant 0 : i32
    return %arg0, %c0_i32, %c0_i32_0 : i32, i32, i32
  }
  func.func @transform_2(%arg0: i32) -> (i32, i32) {
    %c0_i32 = arith.constant 0 : i32
    %c0_i32_0 = arith.constant 0 : i32
    %c0_i32_1 = arith.constant 0 : i32
    return %c0_i32, %c0_i32_0 : i32, i32
  }
  func.func @transform_3(%arg0: i32) -> (i32, i32) {
    %c0_i32 = arith.constant 0 : i32
    %c0_i32_0 = arith.constant 0 : i32
    %c0_i32_1 = arith.constant 0 : i32
    return %c0_i32, %c0_i32_0 : i32, i32
  }
  func.func @transform_4(%arg0: i32) -> (i32, i32) {
    %c0_i32 = arith.constant 0 : i32
    %c0_i32_0 = arith.constant 0 : i32
    %c0_i32_1 = arith.constant 0 : i32
    return %c0_i32, %c0_i32_0 : i32, i32
  }
  func.func @transform_5(%arg0: i32) -> (i32, i32) {
    %c0_i32 = arith.constant 0 : i32
    %c0_i32_0 = arith.constant 0 : i32
    %c0_i32_1 = arith.constant 0 : i32
    return %c0_i32, %c0_i32_0 : i32, i32
  }
  func.func @transform_6(%arg0: i32) -> (i32, i32, i32) {
    %c0_i32 = arith.constant 0 : i32
    %c0_i32_0 = arith.constant 0 : i32
    %c0_i32_1 = arith.constant 0 : i32
    return %arg0, %c0_i32, %c0_i32_0 : i32, i32, i32
  }
}

</mosaic_0001>

<llo_original>
// kernel: tpu_custom_call.1
$region0: #{tpu_custom_call.1}
  #allocation0 [shape = 'u32[]', space=smem, size = 0x4, offset = 0x4, fixed_abs, tag = 'smem constant byte address 0x4 - core index']
  #allocation1 [shape = 'u32[144,128]{1,0:T(1,128)}', space=vmem, size = 0x12000, scoped, tag = 'internal scratch']
  %s0 = inlined_call_operand.vmem [shape: f32[1,32,96], index: 0, kind: input, shape index: {}]
  %s1 = inlined_call_operand.vmem [shape: f32[1,32,32], index: 1, kind: input, shape index: {}]
  %s2 = inlined_call_operand.vmem [shape: f32[96,16], index: 2, kind: input, shape index: {}]
  %s3 = inlined_call_operand.vmem [shape: f32[16,32], index: 3, kind: input, shape index: {}]
  %s4 = inlined_call_operand.vmem [shape: f32[32,2], index: 4, kind: input, shape index: {}]
  %s5 = inlined_call_operand.vmem [shape: f32[1,48], index: 5, kind: input, shape index: {}]
  %s6 = inlined_call_operand.hbm [shape: f32[1,32,32], index: 6, kind: output, shape index: {}]
  %s7 = sld [smem:[#allocation0]]
  $region34: #{tpu_custom_call.1} parent=0
    _
  %s9 = ssub.s32 1, %s7
  %s10 = scalar_select 0, %s9, %s7
  $region1: #{tpu_custom_call.1} parent=0
    #allocation2 [shape = 'u8[16384]{0}', space=vmem, size = 0x4000, scoped, tag = 'output window, operand 0, single buffered']
    #allocation3 [shape = 's32[1]{0}', space=sflag, size = 0x4, scoped, tag = 'scoped memory for tpu_custom_call.1']
    %11 = vsyncpa [#allocation3], 0
    // Predicated region
    $region2: #{tpu_custom_call.1} parent=1 // pred_check
      _
    $region3: #{tpu_custom_call.1} parent=1 // pred_check_branch
      %13 = sbr.rel (0) target = $region5
    $region4: #{tpu_custom_call.1} parent=1 // pred_region
      _
    $region5: #{tpu_custom_call.1} parent=1 // pred_fallthru
      _
    // Predicated region
    $region6: #{tpu_custom_call.1} parent=1 // pred_check
      _
    $region7: #{tpu_custom_call.1} parent=1 // pred_check_branch
      %15 = sbr.rel (0) target = $region9
    $region8: #{tpu_custom_call.1} parent=1 // pred_region
      _
    $region9: #{tpu_custom_call.1} parent=1 // pred_fallthru
      _
    // Predicated region
    $region10: #{tpu_custom_call.1} parent=1 // pred_check
      _
    $region11: #{tpu_custom_call.1} parent=1 // pred_check_branch
      %17 = sbr.rel (0) target = $region13
    $region12: #{tpu_custom_call.1} parent=1 // pred_region
      _
    $region13: #{tpu_custom_call.1} parent=1 // pred_fallthru
      _
    // Predicated region
    $region14: #{tpu_custom_call.1} parent=1 // pred_check
      _
    $region15: #{tpu_custom_call.1} parent=1 // pred_check_branch
      %19 = sbr.rel (0) target = $region17
    $region16: #{tpu_custom_call.1} parent=1 // pred_region
      _
    $region17: #{tpu_custom_call.1} parent=1 // pred_fallthru
      _
    // Predicated region
    $region18: #{tpu_custom_call.1} parent=1 // pred_check
      _
    $region19: #{tpu_custom_call.1} parent=1 // pred_check_branch
      %21 = sbr.rel (0) target = $region21
    $region20: #{tpu_custom_call.1} parent=1 // pred_region
      _
    $region21: #{tpu_custom_call.1} parent=1 // pred_fallthru
      _
    // Predicated region
    $region22: #{tpu_custom_call.1} parent=1 // pred_check
      _
    $region23: #{tpu_custom_call.1} parent=1 // pred_check_branch
      %23 = sbr.rel (0) target = $region25
    $region24: #{tpu_custom_call.1} parent=1 // pred_region
      _
    $region25: #{tpu_custom_call.1} parent=1 // pred_fallthru
      _
    %v24 = vld [vmem:[%s0] sm:$0xff]
    %v25 = vld [vmem:[%s0 + $0x8] sm:$0xff]
    %v26 = vld [vmem:[%s0 + $0x10] sm:$0xff]
    %v27 = vld [vmem:[%s0 + $0x18] sm:$0xff]
    %v28 = vld [vmem:[%s1] sm:$0xff]
    %v29 = vld [vmem:[%s1 + $0x8] sm:$0xff]
    %v30 = vld [vmem:[%s1 + $0x10] sm:$0xff]
    %v31 = vld [vmem:[%s1 + $0x18] sm:$0xff]
    %v32 = vld [vmem:[%s5] sm:$0x1]
    %v33 = vld [vmem:[%s2] sm:$0xff]
    %v34 = vld [vmem:[%s2 + $0x8] sm:$0xff]
    %v35 = vld [vmem:[%s2 + $0x10] sm:$0xff]
    %v36 = vld [vmem:[%s2 + $0x18] sm:$0xff]
    %v37 = vld [vmem:[%s2 + $0x20] sm:$0xff]
    %v38 = vld [vmem:[%s2 + $0x28] sm:$0xff]
    %v39 = vld [vmem:[%s2 + $0x30] sm:$0xff]
    %v40 = vld [vmem:[%s2 + $0x38] sm:$0xff]
    %v41 = vld [vmem:[%s2 + $0x40] sm:$0xff]
    %v42 = vld [vmem:[%s2 + $0x48] sm:$0xff]
    %v43 = vld [vmem:[%s2 + $0x50] sm:$0xff]
    %v44 = vld [vmem:[%s2 + $0x58] sm:$0xff]
    %v46 = vlaneseq
    %v47 = vshrl.u32 %v46, 7
    %v48 = vsub.s32 0, %v47
    %v49 = vrot.slane %v32, %v48
    %vm51 = vcmask 785408
    %v53 = vsel %vm51, %v24, 0
    %v56 = vsel %vm51, %v25, 0
    %v59 = vsel %vm51, %v26, 0
    %v62 = vsel %vm51, %v27, 0
    %64 = vmatprep.subr.mxu0 0.0
    %65 = vmatpush1.msra.mxu0 0.0
    %66 = vmatprep.subr.mxu0 0.0
    %67 = vmatpush1.msra.mxu0 0.0
    %68 = vmatprep.subr.mxu0 0.0
    %69 = vmatpush1.msra.mxu0 0.0
    %70 = vmatprep.subr.mxu0 0.0
    %71 = vmatpush1.msra.mxu0 0.0
    %72 = vmatprep.subr.mxu0 0.0
    %73 = vmatpush1.msra.mxu0 %v44
    %74 = vmatprep.subr.mxu0 0.0
    %75 = vmatpush1.msra.mxu0 %v43
    %76 = vmatprep.subr.mxu0 0.0
    %77 = vmatpush1.msra.mxu0 %v42
    %78 = vmatprep.subr.mxu0 0.0
    %79 = vmatpush1.msra.mxu0 %v41
    %80 = vmatprep.subr.mxu0 0.0
    %81 = vmatpush1.msra.mxu0 %v40
    %82 = vmatprep.subr.mxu0 0.0
    %83 = vmatpush1.msra.mxu0 %v39
    %84 = vmatprep.subr.mxu0 0.0
    %85 = vmatpush1.msra.mxu0 %v38
    %86 = vmatprep.subr.mxu0 0.0
    %87 = vmatpush1.msra.mxu0 %v37
    %88 = vmatprep.subr.mxu0 0.0
    %89 = vmatpush1.msra.mxu0 %v36
    %90 = vmatprep.subr.mxu0 0.0
    %91 = vmatpush1.msra.mxu0 %v35
    %92 = vmatprep.subr.mxu0 0.0
    %93 = vmatpush1.msra.mxu0 %v34
    %94 = vmatprep.subr.mxu0 0.0
    %95 = vmatpush1.msra.mxu0 %v33
    %96 = vmatprep.subr.mxu0 0.0
    %97 = vmatpush2.msra.mxu0 0.0
    %98 = vmatprep.subr.mxu0 0.0
    %99 = vmatpush2.msra.mxu0 0.0
    %100 = vmatprep.subr.mxu0 0.0
    %101 = vmatpush2.msra.mxu0 0.0
    %102 = vmatprep.subr.mxu0 0.0
    %103 = vmatpush2.msra.mxu0 0.0
    %104 = vmatprep.subr.mxu0 0.0
    %105 = vmatpush2.msra.mxu0 0.0
    %106 = vmatprep.subr.mxu0 0.0
    %107 = vmatpush2.msra.mxu0 0.0
    %108 = vmatprep.subr.mxu0 0.0
    %109 = vmatpush2.msra.mxu0 0.0
    %110 = vmatprep.subr.mxu0 0.0
    %111 = vmatpush2.msra.mxu0 0.0
    %112 = vmatprep.subr.mxu0 0.0
    %113 = vmatpush2.msra.mxu0 0.0
    %114 = vmatprep.subr.mxu0 0.0
    %115 = vmatpush2.msra.mxu0 0.0
    %116 = vmatprep.subr.mxu0 0.0
    %117 = vmatpush2.msra.mxu0 0.0
    %118 = vmatprep.subr.mxu0 0.0
    %119 = vmatpush2.msra.mxu0 0.0
    %120 = vmatprep.subr.mxu0 0.0
    %121 = vmatpush2.msra.mxu0 0.0
    %122 = vmatprep.subr.mxu0 0.0
    %123 = vmatpush2.msra.mxu0 0.0
    %124 = vmatprep.subr.mxu0 0.0
    %125 = vmatpush2.msra.mxu0 0.0
    %126 = vmatprep.subr.mxu0 0.0
    %127 = vmatpush2.msra.mxu0 0.0
    %128 = vmatprep.mubr.f32.mxu0 0.0
    %129 = vmatmul.mubr.f32.gmra.mxu0 %v53
    %v130 = vpop.f32.mrf.mxu0
    %v131 = vadd.f32 %v49, %v130
    %v132 = vpop.f32.mrf.mxu0
    %133 = vmatprep.mubr.f32.mxu0 0.0
    %134 = vmatmul.mubr.f32.gmra.mxu0 %v56
    %v135 = vpop.f32.mrf.mxu0
    %v136 = vadd.f32 %v49, %v135
    %v137 = vpop.f32.mrf.mxu0
    %138 = vmatprep.mubr.f32.mxu0 0.0
    %139 = vmatmul.mubr.f32.gmra.mxu0 %v59
    %v140 = vpop.f32.mrf.mxu0
    %v141 = vadd.f32 %v49, %v140
    %v142 = vpop.f32.mrf.mxu0
    %143 = vmatprep.mubr.f32.mxu0 0.0
    %144 = vmatmul.mubr.f32.gmra.mxu0 %v62
    %v145 = vpop.f32.mrf.mxu0
    %v146 = vadd.f32 %v49, %v145
    %v147 = vpop.f32.mrf.mxu0
    %148 = vdwg.mxu0
    %v149 = vmax.f32 %v131, 0.0
    %v150 = vmax.f32 %v136, 0.0
    %v151 = vmax.f32 %v141, 0.0
    %v152 = vmax.f32 %v146, 0.0
    %v153 = vld [vmem:[%s3] sm:$0xff]
    %v154 = vld [vmem:[%s3 + $0x8] sm:$0xff]
    %vm155 = vcmask 130048
    %v157 = vsel %vm155, %v149, 0
    %v160 = vsel %vm155, %v150, 0
    %v163 = vsel %vm155, %v151, 0
    %v166 = vsel %vm155, %v152, 0
    %168 = vmatprep.subr.mxu0 0.0
    %169 = vmatpush1.msra.mxu0 0.0
    %170 = vmatprep.subr.mxu0 0.0
    %171 = vmatpush1.msra.mxu0 0.0
    %172 = vmatprep.subr.mxu0 0.0
    %173 = vmatpush1.msra.mxu0 0.0
    %174 = vmatprep.subr.mxu0 0.0
    %175 = vmatpush1.msra.mxu0 0.0
    %176 = vmatprep.subr.mxu0 0.0
    %177 = vmatpush1.msra.mxu0 0.0
    %178 = vmatprep.subr.mxu0 0.0
    %179 = vmatpush1.msra.mxu0 0.0
    %180 = vmatprep.subr.mxu0 0.0
    %181 = vmatpush1.msra.mxu0 0.0
    %182 = vmatprep.subr.mxu0 0.0
    %183 = vmatpush1.msra.mxu0 0.0
    %184 = vmatprep.subr.mxu0 0.0
    %185 = vmatpush1.msra.mxu0 0.0
    %186 = vmatprep.subr.mxu0 0.0
    %187 = vmatpush1.msra.mxu0 0.0
    %188 = vmatprep.subr.mxu0 0.0
    %189 = vmatpush1.msra.mxu0 0.0
    %190 = vmatprep.subr.mxu0 0.0
    %191 = vmatpush1.msra.mxu0 0.0
    %192 = vmatprep.subr.mxu0 0.0
    %193 = vmatpush1.msra.mxu0 0.0
    %194 = vmatprep.subr.mxu0 0.0
    %195 = vmatpush1.msra.mxu0 0.0
    %196 = vmatprep.subr.mxu0 0.0
    %197 = vmatpush1.msra.mxu0 %v154
    %198 = vmatprep.subr.mxu0 0.0
    %199 = vmatpush1.msra.mxu0 %v153
    %200 = vmatprep.subr.mxu0 0.0
    %201 = vmatpush2.msra.mxu0 0.0
    %202 = vmatprep.subr.mxu0 0.0
    %203 = vmatpush2.msra.mxu0 0.0
    %204 = vmatprep.subr.mxu0 0.0
    %205 = vmatpush2.msra.mxu0 0.0
    %206 = vmatprep.subr.mxu0 0.0
    %207 = vmatpush2.msra.mxu0 0.0
    %208 = vmatprep.subr.mxu0 0.0
    %209 = vmatpush2.msra.mxu0 0.0
    %210 = vmatprep.subr.mxu0 0.0
    %211 = vmatpush2.msra.mxu0 0.0
    %212 = vmatprep.subr.mxu0 0.0
    %213 = vmatpush2.msra.mxu0 0.0
    %214 = vmatprep.subr.mxu0 0.0
    %215 = vmatpush2.msra.mxu0 0.0
    %216 = vmatprep.subr.mxu0 0.0
    %217 = vmatpush2.msra.mxu0 0.0
    %218 = vmatprep.subr.mxu0 0.0
    %219 = vmatpush2.msra.mxu0 0.0
    %220 = vmatprep.subr.mxu0 0.0
    %221 = vmatpush2.msra.mxu0 0.0
    %222 = vmatprep.subr.mxu0 0.0
    %223 = vmatpush2.msra.mxu0 0.0
    %224 = vmatprep.subr.mxu0 0.0
    %225 = vmatpush2.msra.mxu0 0.0
    %226 = vmatprep.subr.mxu0 0.0
    %227 = vmatpush2.msra.mxu0 0.0
    %228 = vmatprep.subr.mxu0 0.0
    %229 = vmatpush2.msra.mxu0 0.0
    %230 = vmatprep.subr.mxu0 0.0
    %231 = vmatpush2.msra.mxu0 0.0
    %232 = vmatprep.mubr.f32.mxu0 0.0
    %233 = vmatmul.mubr.f32.gmra.mxu0 %v157
    %v234 = vpop.f32.mrf.mxu0
    %v235 = vadd.f32 0.0, %v234
    %v236 = vpop.f32.mrf.mxu0
    %237 = vmatprep.mubr.f32.mxu0 0.0
    %238 = vmatmul.mubr.f32.gmra.mxu0 %v160
    %v239 = vpop.f32.mrf.mxu0
    %v240 = vadd.f32 0.0, %v239
    %v241 = vpop.f32.mrf.mxu0
    %242 = vmatprep.mubr.f32.mxu0 0.0
    %243 = vmatmul.mubr.f32.gmra.mxu0 %v163
    %v244 = vpop.f32.mrf.mxu0
    %v245 = vadd.f32 0.0, %v244
    %v246 = vpop.f32.mrf.mxu0
    %247 = vmatprep.mubr.f32.mxu0 0.0
    %248 = vmatmul.mubr.f32.gmra.mxu0 %v166
    %v249 = vpop.f32.mrf.mxu0
    %v250 = vadd.f32 0.0, %v249
    %v251 = vpop.f32.mrf.mxu0
    %252 = vdwg.mxu0
    %v253 = vld [vmem:[%s4] sm:$0xff]
    %v254 = vld [vmem:[%s4 + $0x8] sm:$0xff]
    %v255 = vld [vmem:[%s4 + $0x10] sm:$0xff]
    %v256 = vld [vmem:[%s4 + $0x18] sm:$0xff]
    %vm257 = vcmask 261120
    %v259 = vsel %vm257, %v235, 0
    %v262 = vsel %vm257, %v240, 0
    %v265 = vsel %vm257, %v245, 0
    %v268 = vsel %vm257, %v250, 0
    %270 = vmatprep.subr.mxu0 0.0
    %271 = vmatpush1.msra.mxu0 0.0
    %272 = vmatprep.subr.mxu0 0.0
    %273 = vmatpush1.msra.mxu0 0.0
    %274 = vmatprep.subr.mxu0 0.0
    %275 = vmatpush1.msra.mxu0 0.0
    %276 = vmatprep.subr.mxu0 0.0
    %277 = vmatpush1.msra.mxu0 0.0
    %278 = vmatprep.subr.mxu0 0.0
    %279 = vmatpush1.msra.mxu0 0.0
    %280 = vmatprep.subr.mxu0 0.0
    %281 = vmatpush1.msra.mxu0 0.0
    %282 = vmatprep.subr.mxu0 0.0
    %283 = vmatpush1.msra.mxu0 0.0
    %284 = vmatprep.subr.mxu0 0.0
    %285 = vmatpush1.msra.mxu0 0.0
    %286 = vmatprep.subr.mxu0 0.0
    %287 = vmatpush1.msra.mxu0 0.0
    %288 = vmatprep.subr.mxu0 0.0
    %289 = vmatpush1.msra.mxu0 0.0
    %290 = vmatprep.subr.mxu0 0.0
    %291 = vmatpush1.msra.mxu0 0.0
    %292 = vmatprep.subr.mxu0 0.0
    %293 = vmatpush1.msra.mxu0 0.0
    %294 = vmatprep.subr.mxu0 0.0
    %295 = vmatpush1.msra.mxu0 %v256
    %296 = vmatprep.subr.mxu0 0.0
    %297 = vmatpush1.msra.mxu0 %v255
    %298 = vmatprep.subr.mxu0 0.0
    %299 = vmatpush1.msra.mxu0 %v254
    %300 = vmatprep.subr.mxu0 0.0
    %301 = vmatpush1.msra.mxu0 %v253
    %302 = vmatprep.subr.mxu0 0.0
    %303 = vmatpush2.msra.mxu0 0.0
    %304 = vmatprep.subr.mxu0 0.0
    %305 = vmatpush2.msra.mxu0 0.0
    %306 = vmatprep.subr.mxu0 0.0
    %307 = vmatpush2.msra.mxu0 0.0
    %308 = vmatprep.subr.mxu0 0.0
    %309 = vmatpush2.msra.mxu0 0.0
    %310 = vmatprep.subr.mxu0 0.0
    %311 = vmatpush2.msra.mxu0 0.0
    %312 = vmatprep.subr.mxu0 0.0
    %313 = vmatpush2.msra.mxu0 0.0
    %314 = vmatprep.subr.mxu0 0.0
    %315 = vmatpush2.msra.mxu0 0.0
    %316 = vmatprep.subr.mxu0 0.0
    %317 = vmatpush2.msra.mxu0 0.0
    %318 = vmatprep.subr.mxu0 0.0
    %319 = vmatpush2.msra.mxu0 0.0
    %320 = vmatprep.subr.mxu0 0.0
    %321 = vmatpush2.msra.mxu0 0.0
    %322 = vmatprep.subr.mxu0 0.0
    %323 = vmatpush2.msra.mxu0 0.0
    %324 = vmatprep.subr.mxu0 0.0
    %325 = vmatpush2.msra.mxu0 0.0
    %326 = vmatprep.subr.mxu0 0.0
    %327 = vmatpush2.msra.mxu0 0.0
    %328 = vmatprep.subr.mxu0 0.0
    %329 = vmatpush2.msra.mxu0 0.0
    %330 = vmatprep.subr.mxu0 0.0
    %331 = vmatpush2.msra.mxu0 0.0
    %332 = vmatprep.subr.mxu0 0.0
    %333 = vmatpush2.msra.mxu0 0.0
    %334 = vmatprep.mubr.f32.mxu0 0.0
    %335 = vmatmul.mubr.f32.gmra.mxu0 %v259
    %v336 = vpop.f32.mrf.mxu0
    %v337 = vadd.f32 0.0, %v336
    %v338 = vpop.f32.mrf.mxu0
    %339 = vmatprep.mubr.f32.mxu0 0.0
    %340 = vmatmul.mubr.f32.gmra.mxu0 %v262
    %v341 = vpop.f32.mrf.mxu0
    %v342 = vadd.f32 0.0, %v341
    %v343 = vpop.f32.mrf.mxu0
    %344 = vmatprep.mubr.f32.mxu0 0.0
    %345 = vmatmul.mubr.f32.gmra.mxu0 %v265
    %v346 = vpop.f32.mrf.mxu0
    %v347 = vadd.f32 0.0, %v346
    %v348 = vpop.f32.mrf.mxu0
    %349 = vmatprep.mubr.f32.mxu0 0.0
    %350 = vmatmul.mubr.f32.gmra.mxu0 %v268
    %v351 = vpop.f32.mrf.mxu0
    %v352 = vadd.f32 0.0, %v351
    %v353 = vpop.f32.mrf.mxu0
    %354 = vdwg.mxu0
    %355 = vxpose.xlu0.b32.start [1/16] %v337, 128
    %356 = vxpose.xlu0.b32.cont [2/16] %v342, 128
    %357 = vxpose.xlu0.b32.cont [3/16] %v347, 128
    %358 = vxpose.xlu0.b32.cont [4/16] %v352, 128
    %359 = vxpose.xlu0.b32.cont [5/16] 0.0, 128
    %360 = vxpose.xlu0.b32.cont [6/16] 0.0, 128
    %361 = vxpose.xlu0.b32.cont [7/16] 0.0, 128
    %362 = vxpose.xlu0.b32.cont [8/16] 0.0, 128
    %363 = vxpose.xlu0.b32.cont [9/16] 0.0, 128
    %364 = vxpose.xlu0.b32.cont [10/16] 0.0, 128
    %365 = vxpose.xlu0.b32.cont [11/16] 0.0, 128
    %366 = vxpose.xlu0.b32.cont [12/16] 0.0, 128
    %367 = vxpose.xlu0.b32.cont [13/16] 0.0, 128
    %368 = vxpose.xlu0.b32.cont [14/16] 0.0, 128
    %369 = vxpose.xlu0.b32.cont [15/16] 0.0, 128
    %370 = vxpose.xlu0.b32.end [16/16] 0.0, 128
    %v371 = vpop.trf.xlu0
    %v372 = vpop.trf.xlu0
    %v373 = vpop.trf.xlu0
    %v374 = vpop.trf.xlu0
    %v375 = vpop.trf.xlu0
    %v376 = vpop.trf.xlu0
    %v377 = vpop.trf.xlu0
    %v378 = vpop.trf.xlu0
    %v379 = vpop.trf.xlu0
    %v380 = vpop.trf.xlu0
    %v381 = vpop.trf.xlu0
    %v382 = vpop.trf.xlu0
    %v383 = vpop.trf.xlu0
    %v384 = vpop.trf.xlu0
    %v385 = vpop.trf.xlu0
    %v386 = vpop.trf.xlu0
    %388 = vset.pattern.permute.xlu0 1
    %389 = vperm.xlu0 %388, %v337
    %v390 = vpop.permute.xlu0 %389
    %393 = vset.pattern.permute.xlu0 1
    %394 = vperm.xlu0 %393, %v342
    %v395 = vpop.permute.xlu0 %394
    %398 = vset.pattern.permute.xlu0 1
    %399 = vperm.xlu0 %398, %v347
    %v400 = vpop.permute.xlu0 %399
    %403 = vset.pattern.permute.xlu0 1
    %404 = vperm.xlu0 %403, %v352
    %v405 = vpop.permute.xlu0 %404
    %v407 = vlaneseq
    %v408 = vshrl.u32 %v407, 7
    %v409 = vsub.s32 0, %v408
    %v410 = vrot.slane %v371, %v409
    %v411 = vadd.f32 %v390, %v410
    %v412 = vadd.f32 %v395, %v410
    %v413 = vadd.f32 %v400, %v410
    %v414 = vadd.f32 %v405, %v410
    %vm415 = vcmp.gt.f32.partialorder %v411, 0.0
    %vm416 = vcmp.gt.f32.partialorder %v412, 0.0
    %vm417 = vcmp.gt.f32.partialorder %v413, 0.0
    %vm418 = vcmp.gt.f32.partialorder %v414, 0.0
    %v419 = vmul.f32 %v411, 0.2
    %v420 = vmul.f32 %v412, 0.2
    %v421 = vmul.f32 %v413, 0.2
    %v422 = vmul.f32 %v414, 0.2
    %v423 = vsel %vm415, %v411, %v419
    %v424 = vsel %vm416, %v412, %v420
    %v425 = vsel %vm417, %v413, %v421
    %v426 = vsel %vm418, %v414, %v422
    %vm427 = vcmp.gt.f32.partialorder %v28, 0.0
    %vm428 = vcmp.gt.f32.partialorder %v29, 0.0
    %vm429 = vcmp.gt.f32.partialorder %v30, 0.0
    %vm430 = vcmp.gt.f32.partialorder %v31, 0.0
    %v431 = vsel %vm427, %v423, -1e+30
    %v432 = vsel %vm428, %v424, -1e+30
    %v433 = vsel %vm429, %v425, -1e+30
    %v434 = vsel %vm430, %v426, -1e+30
    %v435 = vsel %vm257, %v431, -inf
    %436 = vmax.xlane.f32.xlu0 %v435
    %v437 = vpop.xlane.xlu0 %436
    %v438 = vsel %vm257, %v432, -inf
    %439 = vmax.xlane.f32.xlu0 %v438
    %v440 = vpop.xlane.xlu0 %439
    %v441 = vsel %vm257, %v433, -inf
    %442 = vmax.xlane.f32.xlu0 %v441
    %v443 = vpop.xlane.xlu0 %442
    %v444 = vsel %vm257, %v434, -inf
    %445 = vmax.xlane.f32.xlu0 %v444
    %v446 = vpop.xlane.xlu0 %445
    %v447 = vsub.f32 %v431, %v437
    %v448 = vsub.f32 %v432, %v440
    %v449 = vsub.f32 %v433, %v443
    %v450 = vsub.f32 %v434, %v446
    %v451 = vmul.f32 %v447, 1.442695
    %v452 = vpow.pop %v451
    %v453 = vmul.f32 %v448, 1.442695
    %v454 = vpow.pop %v453
    %v455 = vmul.f32 %v449, 1.442695
    %v456 = vpow.pop %v455
    %v457 = vmul.f32 %v450, 1.442695
    %v458 = vpow.pop %v457
    %v459 = vsel %vm427, %v452, 0.0
    %v460 = vsel %vm428, %v454, 0.0
    %v461 = vsel %vm429, %v456, 0.0
    %v462 = vsel %vm430, %v458, 0.0
    %v463 = vsel %vm257, %v459, 0.0
    %464 = vadd.xlane.f32.xlu0 %v463
    %v465 = vpop.xlane.xlu0 %464
    %v466 = vsel %vm257, %v460, 0.0
    %467 = vadd.xlane.f32.xlu0 %v466
    %v468 = vpop.xlane.xlu0 %467
    %v469 = vsel %vm257, %v461, 0.0
    %470 = vadd.xlane.f32.xlu0 %v469
    %v471 = vpop.xlane.xlu0 %470
    %v472 = vsel %vm257, %v462, 0.0
    %473 = vadd.xlane.f32.xlu0 %v472
    %v474 = vpop.xlane.xlu0 %473
    %v475 = vmax.f32 %v465, 1e-30
    %v476 = vmax.f32 %v468, 1e-30
    %v477 = vmax.f32 %v471, 1e-30
    %v478 = vmax.f32 %v474, 1e-30
    %v479 = vrcp.pop %v475
    %v480 = vrcp.pop %v476
    %v481 = vrcp.pop %v477
    %v482 = vrcp.pop %v478
    %v483 = vmul.f32 %v459, %v479
    %v484 = vmul.f32 %v460, %v480
    %v485 = vmul.f32 %v461, %v481
    %v486 = vmul.f32 %v462, %v482
    %487 = vrot.lane.b32.xlu0 %v49, 112
    %v488 = vpop.permute.xlu0 %487
    %v491 = vsel %vm257, %v483, 0
    %v494 = vsel %vm257, %v484, 0
    %v497 = vsel %vm257, %v485, 0
    %v500 = vsel %vm257, %v486, 0
    %502 = vmatprep.subr.mxu0 0.0
    %503 = vmatpush1.msra.mxu0 0.0
    %504 = vmatprep.subr.mxu0 0.0
    %505 = vmatpush1.msra.mxu0 0.0
    %506 = vmatprep.subr.mxu0 0.0
    %507 = vmatpush1.msra.mxu0 0.0
    %508 = vmatprep.subr.mxu0 0.0
    %509 = vmatpush1.msra.mxu0 0.0
    %510 = vmatprep.subr.mxu0 0.0
    %511 = vmatpush1.msra.mxu0 0.0
    %512 = vmatprep.subr.mxu0 0.0
    %513 = vmatpush1.msra.mxu0 0.0
    %514 = vmatprep.subr.mxu0 0.0
    %515 = vmatpush1.msra.mxu0 0.0
    %516 = vmatprep.subr.mxu0 0.0
    %517 = vmatpush1.msra.mxu0 0.0
    %518 = vmatprep.subr.mxu0 0.0
    %519 = vmatpush1.msra.mxu0 0.0
    %520 = vmatprep.subr.mxu0 0.0
    %521 = vmatpush1.msra.mxu0 0.0
    %522 = vmatprep.subr.mxu0 0.0
    %523 = vmatpush1.msra.mxu0 0.0
    %524 = vmatprep.subr.mxu0 0.0
    %525 = vmatpush1.msra.mxu0 0.0
    %526 = vmatprep.subr.mxu0 0.0
    %527 = vmatpush1.msra.mxu0 %v250
    %528 = vmatprep.subr.mxu0 0.0
    %529 = vmatpush1.msra.mxu0 %v245
    %530 = vmatprep.subr.mxu0 0.0
    %531 = vmatpush1.msra.mxu0 %v240
    %532 = vmatprep.subr.mxu0 0.0
    %533 = vmatpush1.msra.mxu0 %v235
    %534 = vmatprep.subr.mxu0 0.0
    %535 = vmatpush2.msra.mxu0 0.0
    %536 = vmatprep.subr.mxu0 0.0
    %537 = vmatpush2.msra.mxu0 0.0
    %538 = vmatprep.subr.mxu0 0.0
    %539 = vmatpush2.msra.mxu0 0.0
    %540 = vmatprep.subr.mxu0 0.0
    %541 = vmatpush2.msra.mxu0 0.0
    %542 = vmatprep.subr.mxu0 0.0
    %543 = vmatpush2.msra.mxu0 0.0
    %544 = vmatprep.subr.mxu0 0.0
    %545 = vmatpush2.msra.mxu0 0.0
    %546 = vmatprep.subr.mxu0 0.0
    %547 = vmatpush2.msra.mxu0 0.0
    %548 = vmatprep.subr.mxu0 0.0
    %549 = vmatpush2.msra.mxu0 0.0
    %550 = vmatprep.subr.mxu0 0.0
    %551 = vmatpush2.msra.mxu0 0.0
    %552 = vmatprep.subr.mxu0 0.0
    %553 = vmatpush2.msra.mxu0 0.0
    %554 = vmatprep.subr.mxu0 0.0
    %555 = vmatpush2.msra.mxu0 0.0
    %556 = vmatprep.subr.mxu0 0.0
    %557 = vmatpush2.msra.mxu0 0.0
    %558 = vmatprep.subr.mxu0 0.0
    %559 = vmatpush2.msra.mxu0 0.0
    %560 = vmatprep.subr.mxu0 0.0
    %561 = vmatpush2.msra.mxu0 0.0
    %562 = vmatprep.subr.mxu0 0.0
    %563 = vmatpush2.msra.mxu0 0.0
    %564 = vmatprep.subr.mxu0 0.0
    %565 = vmatpush2.msra.mxu0 0.0
    %566 = vmatprep.mubr.f32.mxu0 0.0
    %567 = vmatmul.mubr.f32.gmra.mxu0 %v491
    %v568 = vpop.f32.mrf.mxu0
    %v569 = vadd.f32 %v488, %v568
    %v570 = vpop.f32.mrf.mxu0
    %571 = vmatprep.mubr.f32.mxu0 0.0
    %572 = vmatmul.mubr.f32.gmra.mxu0 %v494
    %v573 = vpop.f32.mrf.mxu0
    %v574 = vadd.f32 %v488, %v573
    %v575 = vpop.f32.mrf.mxu0
    %576 = vmatprep.mubr.f32.mxu0 0.0
    %577 = vmatmul.mubr.f32.gmra.mxu0 %v497
    %v578 = vpop.f32.mrf.mxu0
    %v579 = vadd.f32 %v488, %v578
    %v580 = vpop.f32.mrf.mxu0
    %581 = vmatprep.mubr.f32.mxu0 0.0
    %582 = vmatmul.mubr.f32.gmra.mxu0 %v500
    %v583 = vpop.f32.mrf.mxu0
    %v584 = vadd.f32 %v488, %v583
    %v585 = vpop.f32.mrf.mxu0
    %586 = vdwg.mxu0
    %v587 = vlaneseq
    %v588 = vand.u32 %v587, 127
    %vm589 = vcmp.lt.s32.totalorder %v588, 16
    %v590 = vtanh.pop %v569
    %v591 = vtanh.pop %v574
    %v592 = vtanh.pop %v579
    %v593 = vtanh.pop %v584
    %v594 = vsel %vm589, %v569, %v590
    %v595 = vsel %vm589, %v574, %v591
    %v596 = vsel %vm589, %v579, %v592
    %v597 = vsel %vm589, %v584, %v593
    %598 = vst.msk [vmem:[#allocation2] sm:$0xff] %vm257, %v594
    %599 = vst.msk [vmem:[#allocation2 + $0x8] sm:$0xff] %vm257, %v595
    %600 = vst.msk [vmem:[#allocation2 + $0x10] sm:$0xff] %vm257, %v596
    %601 = vst.msk [vmem:[#allocation2 + $0x18] sm:$0xff] %vm257, %v597
    // Predicated region
    $region26: #{tpu_custom_call.1} parent=1 // pred_check
      _
    $region27: #{tpu_custom_call.1} parent=1 // pred_check_branch
      %603 = sbr.rel (0) target = $region29
    $region28: #{tpu_custom_call.1} parent=1 // pred_region
      %s605 = ssub.s32 512, 512
      %606 = vsyncadd [#allocation3], %s605
      %s607 = sshll.u32 [#allocation2], 4
      %s608 = int_to_ptr.vmem [resolvable:$true] %s607
      %613 = dma.vmem_to_hbm [thread:$0]  %s608, 512, %s6, [#allocation3], 128, 128, 8
    $region29: #{tpu_custom_call.1} parent=1 // pred_fallthru
      _
    // Predicated region
    $region30: #{tpu_custom_call.1} parent=1 // pred_check
      _
    $region31: #{tpu_custom_call.1} parent=1 // pred_check_branch
      %615 = sbr.rel (0) target = $region33
    $region32: #{tpu_custom_call.1} parent=1 // pred_region
      %616 = dma.done [#allocation3], 512
    $region33: #{tpu_custom_call.1} parent=1 // pred_fallthru
      _
    %617 = vsyncpa [#allocation3], 1

</llo_original>
